<compile_context>
chip_gen: v5e
topology: v5e:2x2
jax: 0.10.0
libtpu: 0.0.40
codegen_flags: <defaults>
</compile_context>

<pallas_src>
import functools

import jax
import jax.numpy as jnp
from jax.experimental import pallas as pl
from jax.experimental.pallas import tpu as pltpu

_ROW = 16                        # row granularity (safe for bf16 (16,128) packing)
_LANE = 128                      # vreg lane width
_K_RESIDENT_BYTES = 16 * 2**20   # keep the whole w1 resident below this
_K_TILE = 2048                   # fc1 contraction tile when w1 must be streamed


def _round_up(x, m):
    return ((x + m - 1) // m) * m


def _choose_k(f_in, h_pad, bpe):
    """F padding and K-tile for the fc1 contraction (static Python ints)."""
    f_pad = _round_up(f_in, _LANE)
    if f_pad * h_pad * bpe <= _K_RESIDENT_BYTES:
        return f_pad, f_pad                   # whole w1 resident, single K step
    f_pad = _round_up(f_in, _K_TILE)
    return f_pad, _K_TILE                     # stream w1 in K panels


def _pick_tm(n, h_pad):
    """Row tile: minimal row padding, >=2 tiles for v7x 2-TC sharding, and
    capped at 128 when the f32 intermediate h would blow vreg/VMEM pressure."""
    cap = 128 if h_pad >= 512 else 512
    cands = [c for c in (128, 256, 512) if c <= cap]
    cands.append(_round_up(min(n, cap), _ROW))
    tm = min(cands, key=lambda t: (_round_up(n, t), -t))
    if _round_up(n, tm) // tm < 2 and n > _ROW:
        tm = _round_up(-(-n // 2), _ROW)      # split rows across both TCs (v7x)
    return tm


def _const_spec(shape, single_buffer=True):
    """BlockSpec with a constant block index; single-buffered when supported
    (a constant block needs no double buffer -> halves its VMEM footprint)."""
    idx = lambda i, k: (0,) * len(shape)
    if single_buffer:
        try:
            return pl.BlockSpec(shape, idx, pipeline_mode=pl.Buffered(1))
        except Exception:                     # older pallas without pipeline_mode
            pass
    return pl.BlockSpec(shape, idx)


def _mlp_kernel(x_ref, w1_ref, b1_ref, w2_ref, b2_ref, o_ref, h_acc):
    """fc2(relu(fc1(x) + b1)) + b2 with the fc1 contraction on grid axis 1."""
    k = pl.program_id(1)

    @pl.when(k == 0)
    def _():
        h_acc[...] = jnp.zeros_like(h_acc)

    # fc1 partial product on the MXU, f32 accumulation in VMEM scratch.
    h_acc[...] += jnp.dot(x_ref[...], w1_ref[...],
                          preferred_element_type=jnp.float32)

    @pl.when(k == pl.num_programs(1) - 1)
    def _():
        h = jnp.maximum(h_acc[...] + b1_ref[...], 0.0)        # f32 bias + ReLU (VPU)
        out = jnp.dot(h.astype(w2_ref.dtype), w2_ref[...],    # fc2 on the MXU
                      preferred_element_type=jnp.float32) + b2_ref[...]
        o_ref[...] = out.astype(o_ref.dtype)                  # lane-dense store


def pad_params(w1, b1, w2, b2, *, compute_dtype=jnp.bfloat16):
    """Pad / cast fc1+fc2 parameters ONCE (hoisted out of the per-call path).

    Weights are cast to `compute_dtype` for the MXU; biases stay f32 and are
    added post-accumulation inside the kernel (better precision than folding).

    w1: [F_in, H]  b1: [H]  w2: [H, D]  b2: [D]   (weights stored [in, out])
    """
    f_in, h = w1.shape
    d = w2.shape[1]
    cd = jnp.dtype(compute_dtype)
    bpe = cd.itemsize

    h_pad = _round_up(h, _LANE)
    d_pad = _round_up(d, _LANE)
    f_pad, _ = _choose_k(f_in, h_pad, bpe)

    w1p = jnp.pad(w1.astype(cd), ((0, f_pad - f_in), (0, h_pad - h)))
    w2p = jnp.pad(w2.astype(cd), ((0, h_pad - h), (0, d_pad - d)))
    b1p = jnp.pad(b1.astype(jnp.float32), (0, h_pad - h)).reshape(1, h_pad)
    b2p = jnp.pad(b2.astype(jnp.float32), (0, d_pad - d)).reshape(1, d_pad)
    return w1p, b1p, w2p, b2p


@functools.partial(jax.jit, static_argnames=("out_dim", "out_dtype"))
def cl_encoder_mlp(x, w1p, b1p, w2p, b2p, *, out_dim, out_dtype=jnp.bfloat16):
    """Fused fc2(relu(fc1(x))) on TPU using pre-padded params from pad_params.

    x: [N, F_in]  ->  [N, out_dim] in `out_dtype`.
    """
    n, f_in = x.shape
    f_pad, h_pad = w1p.shape
    d_pad = w2p.shape[1]
    cd = w1p.dtype
    bpe = jnp.dtype(cd).itemsize
    out_bpe = jnp.dtype(out_dtype).itemsize

    f_pad_chk, tk = _choose_k(f_in, h_pad, bpe)
    assert f_pad_chk == f_pad, "params were padded for a different F_in"

    tm = _pick_tm(n, h_pad)
    n_pad = _round_up(n, tm)
    grid = (n_pad // tm, f_pad // tk)
    n_i, n_k = grid

    # Per-call cost for x only: pad rows/cols to the tile grid + cast to bf16.
    xp = jnp.pad(x.astype(cd), ((0, n_pad - n), (0, f_pad - f_in)))

    # Explicit VMEM budget: v5e default scoped limit is 16 MiB, v7x physical
    # is 64 MiB.  Constant-index weights are single-buffered.
    vmem_est = (tk * h_pad * bpe * (1 if n_k == 1 else 2)    # w1 panel(s)
                + h_pad * d_pad * bpe                        # w2 (resident)
                + 2 * (h_pad + d_pad) * 4                    # b1, b2
                + 2 * tm * tk * bpe                          # x tiles (dbl buf)
                + 2 * tm * d_pad * out_bpe                   # out tiles
                + tm * h_pad * 4)                            # f32 h scratch
    vmem_limit = int(min(96 << 20, max(32 << 20, int(1.5 * vmem_est) + (4 << 20))))

    cost = pl.CostEstimate(
        flops=2 * n_pad * f_pad * h_pad + 2 * n_pad * h_pad * d_pad,
        transcendentals=0,
        bytes_accessed=(n_pad * f_pad * bpe                               # x
                        + f_pad * h_pad * bpe * (n_i if n_k > 1 else 1)   # w1
                        + h_pad * d_pad * bpe + (h_pad + d_pad) * 4       # w2,b
                        + n_pad * d_pad * out_bpe),                       # out
    )

    out = pl.pallas_call(
        _mlp_kernel,
        out_shape=jax.ShapeDtypeStruct((n_pad, d_pad), out_dtype),
        grid_spec=pltpu.PrefetchScalarGridSpec(
            num_scalar_prefetch=0,
            grid=grid,
            in_specs=[
                pl.BlockSpec((tm, tk), lambda i, k: (i, k)),        # x row/K tile
                # w1: resident + single-buffered when K==1, else streamed panels
                (_const_spec((tk, h_pad)) if n_k == 1
                 else pl.BlockSpec((tk, h_pad), lambda i, k: (k, 0))),
                pl.BlockSpec((1, h_pad), lambda i, k: (0, 0)),      # b1 (f32)
                _const_spec((h_pad, d_pad)),                        # w2 resident
                pl.BlockSpec((1, d_pad), lambda i, k: (0, 0)),      # b2 (f32)
            ],
            out_specs=pl.BlockSpec((tm, d_pad), lambda i, k: (i, 0)),
            scratch_shapes=[pltpu.VMEM((tm, h_pad), jnp.float32)],
        ),
        compiler_params=pltpu.CompilerParams(
            dimension_semantics=("parallel", "arbitrary"),
            vmem_limit_bytes=vmem_limit),
        cost_estimate=cost,
    )(xp, w1p, b1p, w2p, b2p)

    return out[:n, :out_dim]


def cl_encoder_forward(ori_feature, feature_sub_graph, params, *, dim_latent):
    """Mirrors ClEncoder.forward's MLP part with a single fused launch and a
    single weight DMA: returns (x, x_1).
    TODO(synk): GCN-VAE branch (mask_test_edges / preprocess_graph /
    GCNModelVAE / loss_function) is host-side scipy + external modules."""
    n = ori_feature.shape[0]
    feat_all = jnp.concatenate([ori_feature, feature_sub_graph], axis=0)
    out_all = cl_encoder_mlp(feat_all, *params, out_dim=dim_latent)
    return out_all[:n], out_all[n:]


def init_params(key, feature_dim, dim_latent, dtype=jnp.float32):
    """Deterministic init mirroring nn.Linear shapes:
    fc1: Linear(feature_dim, dim_latent*4), fc2: Linear(dim_latent*4, dim_latent).
    Weights stored as [in, out] (transposed vs torch's [out, in])."""
    k1, k2, k3, k4 = jax.random.split(key, 4)
    hidden = dim_latent * 4
    w1 = (jax.random.normal(k1, (feature_dim, hidden), dtype) /
          jnp.sqrt(jnp.asarray(feature_dim, dtype)))
    b1 = jax.random.normal(k2, (hidden,), dtype) * 0.01
    w2 = (jax.random.normal(k3, (hidden, dim_latent), dtype) /
          jnp.sqrt(jnp.asarray(hidden, dtype)))
    b2 = jax.random.normal(k4, (dim_latent,), dtype) * 0.01
    return w1, b1, w2, b2


def _ref_mlp_f32(x, w1, b1, w2, b2):
    h = jnp.maximum(x @ w1 + b1, 0.0)
    return h @ w2 + b2


def _ref_mlp_bf16(x, w1, b1, w2, b2, cd=jnp.bfloat16):
    # mirrors the kernel: bf16 operands, f32 accumulation, f32 post-add biases
    h = jnp.dot(x.astype(cd), w1.astype(cd), preferred_element_type=jnp.float32)
    h = jnp.maximum(h + b1.astype(jnp.float32), 0.0)
    out = jnp.dot(h.astype(cd), w2.astype(cd), preferred_element_type=jnp.float32)
    return out + b2.astype(jnp.float32)


if __name__ == "__main__":
    key = jax.random.PRNGKey(0)
    kp, kx, ks = jax.random.split(key, 3)

    N = 16            # nodes in ori_feature
    N_sub = 8         # nodes in the extracted sub-graph
    F_in = 32         # feature.shape[1]
    dim_latent = 8    # hidden = dim_latent * 4 = 32

    w1, b1, w2, b2 = init_params(kp, F_in, dim_latent)
    ori_feature = jax.random.normal(kx, (N, F_in), jnp.float32)
    feature_sub_graph = jax.random.normal(ks, (N_sub, F_in), jnp.float32)

    # Pad / cast the weights ONCE (hoisted out of the per-call path).
    params = pad_params(w1, b1, w2, b2)

    # forward(): one fused launch for both feature matrices, then split.
    x, x_1 = cl_encoder_forward(ori_feature, feature_sub_graph, params,
                                dim_latent=dim_latent)
    x, x_1 = jax.block_until_ready((x, x_1))

    assert x.shape == (N, dim_latent) and x_1.shape == (N_sub, dim_latent)

    out_all = jnp.concatenate([x, x_1], axis=0).astype(jnp.float32)
    feat_all = jnp.concatenate([ori_feature, feature_sub_graph], axis=0)
    ref_bf16 = _ref_mlp_bf16(feat_all, w1, b1, w2, b2)
    ref_f32 = _ref_mlp_f32(feat_all, w1, b1, w2, b2)
    assert jnp.allclose(out_all, ref_bf16, atol=2e-2, rtol=2e-2), \
        "mismatch vs bf16-mirrored reference"
    assert jnp.allclose(out_all, ref_f32, atol=6e-2, rtol=6e-2), \
        "mismatch vs f32 reference"

    print("KERNEL_OK")
</pallas_src>

<mosaic_0001>
module attributes {stable_mosaic.version = 11 : i64} {
  func.func @_mlp_kernel(%arg0: i32, %arg1: i32, %arg2: memref<16x128xbf16, #tpu.memory_space<vmem>>, %arg3: memref<128x128xbf16, #tpu.memory_space<vmem>>, %arg4: memref<1x128xf32, #tpu.memory_space<vmem>>, %arg5: memref<128x128xbf16, #tpu.memory_space<vmem>>, %arg6: memref<1x128xf32, #tpu.memory_space<vmem>>, %arg7: memref<16x128xbf16, #tpu.memory_space<vmem>>, %arg8: memref<16x128xf32, #tpu.memory_space<vmem>>) attributes {dimension_semantics = [#tpu.dimension_semantics<parallel>, #tpu.dimension_semantics<arbitrary>], iteration_bounds = array<i64: 2, 1>, scalar_prefetch = 0 : i64, scratch_operands = 1 : i64, tpu.core_type = #tpu.core_type<tc>, window_params = [{transform_indices = @transform_0, window_bounds = array<i64: 16, 128>}, {pipeline_mode = #tpu.pipeline_mode<synchronous>, transform_indices = @transform_1, window_bounds = array<i64: 128, 128>}, {pipeline_mode = #tpu.pipeline_mode<synchronous>, transform_indices = @transform_2, window_bounds = array<i64: 1, 128>}, {pipeline_mode = #tpu.pipeline_mode<synchronous>, transform_indices = @transform_3, window_bounds = array<i64: 128, 128>}, {pipeline_mode = #tpu.pipeline_mode<synchronous>, transform_indices = @transform_4, window_bounds = array<i64: 1, 128>}, {transform_indices = @transform_5, window_bounds = array<i64: 16, 128>}]} {
    %c0_i32 = arith.constant 0 : i32
    %0 = arith.cmpi eq, %arg1, %c0_i32 : i32
    %1 = arith.extui %0 : i1 to i32
    %c0_i32_0 = arith.constant 0 : i32
    %2 = arith.cmpi ne, %1, %c0_i32_0 : i32
    scf.if %2 {
      %cst_10 = arith.constant 0.000000e+00 : f32
      %12 = vector.broadcast %cst_10 : f32 to vector<16x128xf32>
      %c0_11 = arith.constant 0 : index
      %c0_12 = arith.constant 0 : index
      %13 = vector.load %arg8[%c0_11, %c0_12] : memref<16x128xf32, #tpu.memory_space<vmem>>, vector<16x128xf32>
      tpu.vector_store %arg8[%c0_11, %c0_12], %12 {strides = array<i32>} : memref<16x128xf32, #tpu.memory_space<vmem>>, vector<16x128xf32>,
    } else {
    }
    %c0 = arith.constant 0 : index
    %c0_1 = arith.constant 0 : index
    %3 = vector.load %arg8[%c0, %c0_1] : memref<16x128xf32, #tpu.memory_space<vmem>>, vector<16x128xf32>
    %c0_2 = arith.constant 0 : index
    %c0_3 = arith.constant 0 : index
    %4 = vector.load %arg2[%c0_2, %c0_3] : memref<16x128xbf16, #tpu.memory_space<vmem>>, vector<16x128xbf16>
    %c0_4 = arith.constant 0 : index
    %c0_5 = arith.constant 0 : index
    %5 = vector.load %arg3[%c0_4, %c0_5] : memref<128x128xbf16, #tpu.memory_space<vmem>>, vector<128x128xbf16>
    %cst = arith.constant dense<0.000000e+00> : vector<16x128xf32>
    %6 = tpu.matmul %4, %5, %cst {dimension_numbers = #tpu.dot_dimension_numbers<[1], [0], [0], [1], [0, 0, 1, 1], [], []>} : vector<16x128xbf16>, vector<128x128xbf16>, vector<16x128xf32> -> vector<16x128xf32>
    %7 = arith.addf %3, %6 : vector<16x128xf32>
    %c0_6 = arith.constant 0 : index
    %c0_7 = arith.constant 0 : index
    %8 = vector.load %arg8[%c0_6, %c0_7] : memref<16x128xf32, #tpu.memory_space<vmem>>, vector<16x128xf32>
    tpu.vector_store %arg8[%c0_6, %c0_7], %7 {strides = array<i32>} : memref<16x128xf32, #tpu.memory_space<vmem>>, vector<16x128xf32>,
    %c0_i32_8 = arith.constant 0 : i32
    %9 = arith.cmpi eq, %arg1, %c0_i32_8 : i32
    %10 = arith.extui %9 : i1 to i32
    %c0_i32_9 = arith.constant 0 : i32
    %11 = arith.cmpi ne, %10, %c0_i32_9 : i32
    scf.if %11 {
      %c0_10 = arith.constant 0 : index
      %c0_11 = arith.constant 0 : index
      %12 = vector.load %arg8[%c0_10, %c0_11] : memref<16x128xf32, #tpu.memory_space<vmem>>, vector<16x128xf32>
      %c0_12 = arith.constant 0 : index
      %c0_13 = arith.constant 0 : index
      %13 = vector.load %arg4[%c0_12, %c0_13] : memref<1x128xf32, #tpu.memory_space<vmem>>, vector<1x128xf32>
      %14 = vector.broadcast %13 : vector<1x128xf32> to vector<16x128xf32>
      %15 = arith.addf %12, %14 : vector<16x128xf32>
      %cst_14 = arith.constant 0.000000e+00 : f32
      %16 = vector.broadcast %cst_14 : f32 to vector<16x128xf32>
      %17 = arith.maximumf %15, %16 : vector<16x128xf32>
      %18 = arith.truncf %17 : vector<16x128xf32> to vector<16x128xbf16>
      %c0_15 = arith.constant 0 : index
      %c0_16 = arith.constant 0 : index
      %19 = vector.load %arg5[%c0_15, %c0_16] : memref<128x128xbf16, #tpu.memory_space<vmem>>, vector<128x128xbf16>
      %cst_17 = arith.constant dense<0.000000e+00> : vector<16x128xf32>
      %20 = tpu.matmul %18, %19, %cst_17 {dimension_numbers = #tpu.dot_dimension_numbers<[1], [0], [0], [1], [0, 0, 1, 1], [], []>} : vector<16x128xbf16>, vector<128x128xbf16>, vector<16x128xf32> -> vector<16x128xf32>
      %c0_18 = arith.constant 0 : index
      %c0_19 = arith.constant 0 : index
      %21 = vector.load %arg6[%c0_18, %c0_19] : memref<1x128xf32, #tpu.memory_space<vmem>>, vector<1x128xf32>
      %22 = vector.broadcast %21 : vector<1x128xf32> to vector<16x128xf32>
      %23 = arith.addf %20, %22 : vector<16x128xf32>
      %24 = arith.truncf %23 : vector<16x128xf32> to vector<16x128xbf16>
      %c0_20 = arith.constant 0 : index
      %c0_21 = arith.constant 0 : index
      %25 = vector.load %arg7[%c0_20, %c0_21] : memref<16x128xbf16, #tpu.memory_space<vmem>>, vector<16x128xbf16>
      tpu.vector_store %arg7[%c0_20, %c0_21], %24 {strides = array<i32>} : memref<16x128xbf16, #tpu.memory_space<vmem>>, vector<16x128xbf16>,
    } else {
    }
    return
  }
  func.func @transform_0(%arg0: i32, %arg1: i32) -> (i32, i32) {
    %c0_i32 = arith.constant 0 : i32
    return %arg0, %arg1 : i32, i32
  }
  func.func @transform_1(%arg0: i32, %arg1: i32) -> (i32, i32) {
    %c0_i32 = arith.constant 0 : i32
    %c0_i32_0 = arith.constant 0 : i32
    %c0_i32_1 = arith.constant 0 : i32
    return %c0_i32, %c0_i32_0 : i32, i32
  }
  func.func @transform_2(%arg0: i32, %arg1: i32) -> (i32, i32) {
    %c0_i32 = arith.constant 0 : i32
    %c0_i32_0 = arith.constant 0 : i32
    %c0_i32_1 = arith.constant 0 : i32
    return %c0_i32, %c0_i32_0 : i32, i32
  }
  func.func @transform_3(%arg0: i32, %arg1: i32) -> (i32, i32) {
    %c0_i32 = arith.constant 0 : i32
    %c0_i32_0 = arith.constant 0 : i32
    %c0_i32_1 = arith.constant 0 : i32
    return %c0_i32, %c0_i32_0 : i32, i32
  }
  func.func @transform_4(%arg0: i32, %arg1: i32) -> (i32, i32) {
    %c0_i32 = arith.constant 0 : i32
    %c0_i32_0 = arith.constant 0 : i32
    %c0_i32_1 = arith.constant 0 : i32
    return %c0_i32, %c0_i32_0 : i32, i32
  }
  func.func @transform_5(%arg0: i32, %arg1: i32) -> (i32, i32) {
    %c0_i32 = arith.constant 0 : i32
    %c0_i32_0 = arith.constant 0 : i32
    return %arg0, %c0_i32 : i32, i32
  }
}

</mosaic_0001>

<llo_original>
// kernel: cl_encoder_mlp.1
$region0: #{cl_encoder_mlp.1}
  #allocation0 [shape = 'u32[]', space=smem, size = 0x4, offset = 0x4, fixed_abs, tag = 'smem constant byte address 0x4 - core index']
  #allocation1 [shape = 'u32[72,128]{1,0:T(1,128)}', space=vmem, size = 0x9000, scoped, tag = 'internal scratch']
  #allocation2 [shape = 'f32[16,128]{1,0:T(8,128)}', space=vmem, size = 0x2000, scoped, tag = 'scratch operand']
  %s0 = inlined_call_operand.vmem [shape: bf16[32,128], index: 0, kind: input, shape index: {}]
  %s1 = inlined_call_operand.vmem [shape: bf16[128,128], index: 1, kind: input, shape index: {}]
  %s2 = inlined_call_operand.vmem [shape: f32[1,128], index: 2, kind: input, shape index: {}]
  %s3 = inlined_call_operand.hbm [shape: bf16[128,128], index: 3, kind: input, shape index: {}]
  %s4 = inlined_call_operand.vmem [shape: f32[1,128], index: 4, kind: input, shape index: {}]
  %s5 = inlined_call_operand.vmem [shape: bf16[32,128], index: 5, kind: output, shape index: {}]
  %s6 = sld [smem:[#allocation0]]
  $region65: #{cl_encoder_mlp.1} parent=0
    _
  %s8 = ssub.s32 1, %s6
  %s9 = scalar_select 0, %s8, %s6
  $region1: #{cl_encoder_mlp.1} parent=0
    #allocation3 [shape = 'u8[32768]{0}', space=vmem, size = 0x8000, scoped, tag = 'input window, operand 3, single buffered']
    #allocation4 [shape = 's32[2]{0}', space=sflag, size = 0x8, scoped, tag = 'scoped memory for cl_encoder_mlp.1']
    %10 = vsyncpa [#allocation4], 0
    loop: start=0, step=1, limit=4
    $region2: #{cl_encoder_mlp.1} parent=1 // loop_pre_header
      _
    $region3: #{cl_encoder_mlp.1} parent=1 // loop_header
      %s12 = sphi 0, %s16
      %p13 = scmp.ge.s32.totalorder %s12, 4
      %s19 = sphi 0, %s31
      %s20 = sphi 0, %s27
      %s21 = sphi 0, %s19
      %s22 = sphi 0, %s20
      %s23 = sphi 0, %s21
      %s24 = sphi 0, %s22
      %s36 = sphi 0, %s38
      %s39 = sphi 0, %s36
      %s40 = sphi 0, %s39
      %s56 = sphi 0, %s40
      %s60 = sphi 0, %s60
      %s62 = sphi 0, %s60
      %s63 = sphi 0, %s62
      %s77 = sphi 0, %s63
      %s81 = sphi 0, %s81
      %s83 = sphi 0, %s81
      %s84 = sphi 0, %s83
      %s98 = sphi 0, %s84
      %s102 = sphi 0, %s102
      %s104 = sphi 0, %s102
      %s105 = sphi 0, %s104
      %s119 = sphi 0, %s105
      %s123 = sphi 0, %s123
      %s125 = sphi 0, %s123
      %s126 = sphi 0, %s125
      %s140 = sphi 0, %s126
      %s146 = sphi 0, %s148
      %s149 = sphi 0, %s146
      %s150 = sphi 0, %s149
      %s166 = sphi 0, %s150
    $region4: #{cl_encoder_mlp.1} parent=1 // loop_header_branch
      %15 = sbr.rel (%p13) target = $region8
    $region5: #{cl_encoder_mlp.1} parent=1 // loop_body
      %s17 = ssub.s32 %s12, 1
      %s18 = ssub.s32 %s12, 2
      %s25 = sadd.s32 1, %s20
      %p26 = scmp.ge.s32.totalorder %s25, 1
      %s27 = scalar_select %p26, 0, %s25
      %s28 = sadd.s32 1, %s19
      %s29 = scalar_select %p26, %s28, %s19
      %p30 = scmp.ge.s32.totalorder %s29, 2
      %s31 = scalar_select %p30, 0, %s29
      %s32 = ssub.s32 %s19, %s31
      %s33 = ssub.s32 %s20, %s27
      %s34 = sor.u32 %s32, %s33
      %p35 = scmp.eq.s32.totalorder %s34, 0
      %s37 = sadd.s32 %s36, 1
      %s38 = scalar_select %p35, %s36, %s37
      %p41 = pneg %p35
      %p42 = scmp.eq.s32.totalorder %s12, 1
      %p43 = por %p41, %p42
      %p44 = scmp.ne.s32.totalorder %s36, %s39
      %p45 = scmp.eq.s32.totalorder %s12, 0
      %p46 = por %p44, %p45
      %p47 = scmp.ne.s32.totalorder %s36, %s39
      %p48 = scmp.eq.s32.totalorder %s17, 1
      %p49 = por %p47, %p48
      %p50 = scmp.ne.s32.totalorder %s39, %s40
      %p51 = scmp.eq.s32.totalorder %s17, 0
      %p52 = por %p50, %p51
      %p53 = scmp.ne.s32.totalorder %s39, %s40
      %p54 = scmp.eq.s32.totalorder %s18, 1
      %p55 = por %p53, %p54
      %p57 = scmp.ne.s32.totalorder %s40, %s56
      %p58 = scmp.eq.s32.totalorder %s18, 0
      %p59 = por %p57, %p58
      %s61 = sadd.s32 %s60, 1
      %p64 = scmp.eq.s32.totalorder %s12, 1
      %p65 = scmp.ne.s32.totalorder %s60, %s62
      %p66 = scmp.eq.s32.totalorder %s12, 0
      %p67 = por %p65, %p66
      %p68 = scmp.ne.s32.totalorder %s60, %s62
      %p69 = scmp.eq.s32.totalorder %s17, 1
      %p70 = por %p68, %p69
      %p71 = scmp.ne.s32.totalorder %s62, %s63
      %p72 = scmp.eq.s32.totalorder %s17, 0
      %p73 = por %p71, %p72
      %p74 = scmp.ne.s32.totalorder %s62, %s63
      %p75 = scmp.eq.s32.totalorder %s18, 1
      %p76 = por %p74, %p75
      %p78 = scmp.ne.s32.totalorder %s63, %s77
      %p79 = scmp.eq.s32.totalorder %s18, 0
      %p80 = por %p78, %p79
      %s82 = sadd.s32 %s81, 1
      %p85 = scmp.eq.s32.totalorder %s12, 1
      %p86 = scmp.ne.s32.totalorder %s81, %s83
      %p87 = scmp.eq.s32.totalorder %s12, 0
      %p88 = por %p86, %p87
      %p89 = scmp.ne.s32.totalorder %s81, %s83
      %p90 = scmp.eq.s32.totalorder %s17, 1
      %p91 = por %p89, %p90
      %p92 = scmp.ne.s32.totalorder %s83, %s84
      %p93 = scmp.eq.s32.totalorder %s17, 0
      %p94 = por %p92, %p93
      %p95 = scmp.ne.s32.totalorder %s83, %s84
      %p96 = scmp.eq.s32.totalorder %s18, 1
      %p97 = por %p95, %p96
      %p99 = scmp.ne.s32.totalorder %s84, %s98
      %p100 = scmp.eq.s32.totalorder %s18, 0
      %p101 = por %p99, %p100
      %s103 = sadd.s32 %s102, 1
      %p106 = scmp.eq.s32.totalorder %s12, 1
      %p107 = scmp.ne.s32.totalorder %s102, %s104
      %p108 = scmp.eq.s32.totalorder %s12, 0
      %p109 = por %p107, %p108
      %p110 = scmp.ne.s32.totalorder %s102, %s104
      %p111 = scmp.eq.s32.totalorder %s17, 1
      %p112 = por %p110, %p111
      %p113 = scmp.ne.s32.totalorder %s104, %s105
      %p114 = scmp.eq.s32.totalorder %s17, 0
      %p115 = por %p113, %p114
      %p116 = scmp.ne.s32.totalorder %s104, %s105
      %p117 = scmp.eq.s32.totalorder %s18, 1
      %p118 = por %p116, %p117
      %p120 = scmp.ne.s32.totalorder %s105, %s119
      %p121 = scmp.eq.s32.totalorder %s18, 0
      %p122 = por %p120, %p121
      %s124 = sadd.s32 %s123, 1
      %p127 = scmp.eq.s32.totalorder %s12, 1
      %p128 = scmp.ne.s32.totalorder %s123, %s125
      %p129 = scmp.eq.s32.totalorder %s12, 0
      %p130 = por %p128, %p129
      %p131 = scmp.ne.s32.totalorder %s123, %s125
      %p132 = scmp.eq.s32.totalorder %s17, 1
      %p133 = por %p131, %p132
      %p134 = scmp.ne.s32.totalorder %s125, %s126
      %p135 = scmp.eq.s32.totalorder %s17, 0
      %p136 = por %p134, %p135
      %p137 = scmp.ne.s32.totalorder %s125, %s126
      %p138 = scmp.eq.s32.totalorder %s18, 1
      %p139 = por %p137, %p138
      %p141 = scmp.ne.s32.totalorder %s126, %s140
      %p142 = scmp.eq.s32.totalorder %s18, 0
      %p143 = por %p141, %p142
      %s144 = ssub.s32 %s19, %s31
      %p145 = scmp.eq.s32.totalorder %s144, 0
      %s147 = sadd.s32 %s146, 1
      %s148 = scalar_select %p145, %s146, %s147
      %p151 = pneg %p145
      %p152 = scmp.eq.s32.totalorder %s12, 1
      %p153 = por %p151, %p152
      %p154 = scmp.ne.s32.totalorder %s146, %s149
      %p155 = scmp.eq.s32.totalorder %s12, 0
      %p156 = por %p154, %p155
      %p157 = scmp.ne.s32.totalorder %s146, %s149
      %p158 = scmp.eq.s32.totalorder %s17, 1
      %p159 = por %p157, %p158
      %p160 = scmp.ne.s32.totalorder %s149, %s150
      %p161 = scmp.eq.s32.totalorder %s17, 0
      %p162 = por %p160, %p161
      %p163 = scmp.ne.s32.totalorder %s149, %s150
      %p164 = scmp.eq.s32.totalorder %s18, 1
      %p165 = por %p163, %p164
      %p167 = scmp.ne.s32.totalorder %s150, %s166
      %p168 = scmp.eq.s32.totalorder %s18, 0
      %p169 = por %p167, %p168
      %p170 = scmp.le.s32.totalorder 1, %s12
      %p171 = scmp.lt.s32.totalorder %s12, 3
      %p172 = pnand %p170, %p171
      %p173 = pneg %p172
      // Predicated region
      $region9: #{cl_encoder_mlp.1} parent=5 // pred_check
        _
      $region10: #{cl_encoder_mlp.1} parent=5 // pred_check_branch
        %175 = sbr.rel (%p172) target = $region12
      $region11: #{cl_encoder_mlp.1} parent=5 // pred_region
        %s176 = ssub.s32 %s12, 1
        // Predicated region
        $region13: #{cl_encoder_mlp.1} parent=11 // pred_check
          %p177 = pneg %p73
        $region14: #{cl_encoder_mlp.1} parent=11 // pred_check_branch
          %179 = sbr.rel (%p177) target = $region16
        $region15: #{cl_encoder_mlp.1} parent=11 // pred_region
          _
        $region16: #{cl_encoder_mlp.1} parent=11 // pred_fallthru
          _
        // Predicated region
        $region17: #{cl_encoder_mlp.1} parent=11 // pred_check
          %p180 = pneg %p94
        $region18: #{cl_encoder_mlp.1} parent=11 // pred_check_branch
          %182 = sbr.rel (%p180) target = $region20
        $region19: #{cl_encoder_mlp.1} parent=11 // pred_region
          _
        $region20: #{cl_encoder_mlp.1} parent=11 // pred_fallthru
          _
        // Predicated region
        $region21: #{cl_encoder_mlp.1} parent=11 // pred_check
          %p183 = pneg %p115
        $region22: #{cl_encoder_mlp.1} parent=11 // pred_check_branch
          %185 = sbr.rel (%p183) target = $region24
        $region23: #{cl_encoder_mlp.1} parent=11 // pred_region
          %187 = vsyncadd [#allocation4], 0
          %s188 = sshll.u32 %s3, 4
          %s189 = int_to_ptr.hbm [resolvable:$true] %s188
          %s190 = sshll.u32 [#allocation3], 4
          %s191 = int_to_ptr.vmem [resolvable:$true] %s190
          %196 = dma.hbm_to_vmem [thread:$0]  %s189, 1024, %s191, [#allocation4], 64, 64, 4
        $region24: #{cl_encoder_mlp.1} parent=11 // pred_fallthru
          _
        // Predicated region
        $region25: #{cl_encoder_mlp.1} parent=11 // pred_check
          %p197 = pneg %p136
        $region26: #{cl_encoder_mlp.1} parent=11 // pred_check_branch
          %199 = sbr.rel (%p197) target = $region28
        $region27: #{cl_encoder_mlp.1} parent=11 // pred_region
          _
        $region28: #{cl_encoder_mlp.1} parent=11 // pred_fallthru
          _
      $region12: #{cl_encoder_mlp.1} parent=5 // pred_fallthru
        _
      %p200 = scmp.lt.s32.totalorder %s12, 2
      // Predicated region
      $region29: #{cl_encoder_mlp.1} parent=5 // pred_check
        %p201 = pneg %p200
      $region30: #{cl_encoder_mlp.1} parent=5 // pred_check_branch
        %203 = sbr.rel (%p201) target = $region32
      $region31: #{cl_encoder_mlp.1} parent=5 // pred_region
        // Predicated region
        $region33: #{cl_encoder_mlp.1} parent=31 // pred_check
          %p204 = pneg %p46
        $region34: #{cl_encoder_mlp.1} parent=31 // pred_check_branch
          %206 = sbr.rel (%p204) target = $region36
        $region35: #{cl_encoder_mlp.1} parent=31 // pred_region
          %s207 = smul.u32 2, %s19
          %p208 = scmp.lt.s32.totalorder %s207, 3
          %s209 = scalar_select %p208, %s207, 3
          %p210 = scmp.lt.s32.totalorder %s20, 0
          %s211 = scalar_select %p210, %s20, 0
          %s212 = sadd.s32 %s211, %s209
          %s213 = smul.addr %s212, 4
          %s214 = scalar_lea.vmem %s0, %s213
          %s215 = smul.u32 2, %s19
        $region36: #{cl_encoder_mlp.1} parent=31 // pred_fallthru
          _
      $region32: #{cl_encoder_mlp.1} parent=5 // pred_fallthru
        _
      %p216 = scmp.le.s32.totalorder 1, %s12
      %p217 = scmp.lt.s32.totalorder %s12, 3
      %p218 = pnand %p216, %p217
      %p219 = pneg %p218
      // Predicated region
      $region37: #{cl_encoder_mlp.1} parent=5 // pred_check
        _
      $region38: #{cl_encoder_mlp.1} parent=5 // pred_check_branch
        %221 = sbr.rel (%p218) target = $region40
      $region39: #{cl_encoder_mlp.1} parent=5 // pred_region
        %s222 = ssub.s32 %s12, 1
        // Predicated region
        $region41: #{cl_encoder_mlp.1} parent=39 // pred_check
          %p223 = pneg %p115
        $region42: #{cl_encoder_mlp.1} parent=39 // pred_check_branch
          %225 = sbr.rel (%p223) target = $region44
        $region43: #{cl_encoder_mlp.1} parent=39 // pred_region
          %227 = dma.done [#allocation4], 1024
        $region44: #{cl_encoder_mlp.1} parent=39 // pred_fallthru
          _
        %s228 = smul.u32 2, %s21
        %p229 = scmp.lt.s32.totalorder %s228, 3
        %s230 = scalar_select %p229, %s228, 3
        %p231 = scmp.lt.s32.totalorder %s22, 0
        %s232 = scalar_select %p231, %s22, 0
        %s233 = sadd.s32 %s232, %s230
        %s234 = smul.addr %s233, 4
        %s235 = scalar_lea.vmem %s0, %s234
        %p236 = pneg %p52
        %p237 = pneg %p49
        %p238 = pneg %p73
        %p239 = pneg %p70
        %p240 = pneg %p94
        %p241 = pneg %p91
        %p242 = pneg %p115
        %p243 = pneg %p112
        %p244 = pneg %p136
        %p245 = pneg %p133
        %p246 = pneg %p162
        %p247 = pneg %p159
        %s248 = smul.u32 2, %s21
        %p249 = scmp.lt.s32.totalorder %s248, 3
        %s250 = scalar_select %p249, %s248, 3
        %s251 = smul.addr %s250, 4
        %s252 = scalar_lea.vmem %s5, %s251
        %s253 = smul.u32 2, %s21
        %p254 = scmp.lt.s32.totalorder %s253, 3
        %s255 = scalar_select %p254, %s253, 3
        %p256 = scmp.lt.s32.totalorder %s22, 0
        %s257 = scalar_select %p256, %s22, 0
        %s258 = sadd.s32 %s257, %s255
        %s259 = smul.addr %s258, 4
        %s260 = scalar_lea.vmem %s0, %s259
        %s261 = smul.u32 2, %s21
        %s262 = smul.u32 2, %s21
        %p263 = scmp.lt.s32.totalorder %s262, 3
        %s264 = scalar_select %p263, %s262, 3
        %s265 = smul.addr %s264, 4
        %s266 = scalar_lea.vmem %s5, %s265
        %s267 = smul.u32 2, %s21
        %p268 = scmp.eq.s32.totalorder %s22, 0
        // Predicated region
        $region45: #{cl_encoder_mlp.1} parent=39 // pred_check
          %p269 = pneg %p268
        $region46: #{cl_encoder_mlp.1} parent=39 // pred_check_branch
          %271 = sbr.rel (%p269) target = $region48
        $region47: #{cl_encoder_mlp.1} parent=39 // pred_region
          %272 = vst [vmem:[#allocation2] sm:$0xff] 0.0
          %273 = vst [vmem:[#allocation2 + $0x8] sm:$0xff] 0.0
        $region48: #{cl_encoder_mlp.1} parent=39 // pred_fallthru
          _
        %v274 = vld [vmem:[#allocation2] sm:$0xff]
        %v275 = vld [vmem:[#allocation2 + $0x8] sm:$0xff]
        %v276 = vld [vmem:[%s260] sm:$0xf]
        %v277 = vld [vmem:[%s260 + $0x4] sm:$0xf]
        %v278 = vld [vmem:[%s1] sm:$0xf]
        %v279 = vld [vmem:[%s1 + $0x4] sm:$0xf]
        %v280 = vld [vmem:[%s1 + $0x8] sm:$0xf]
        %v281 = vld [vmem:[%s1 + $0xc] sm:$0xf]
        %v282 = vld [vmem:[%s1 + $0x10] sm:$0xf]
        %v283 = vld [vmem:[%s1 + $0x14] sm:$0xf]
        %v284 = vld [vmem:[%s1 + $0x18] sm:$0xf]
        %v285 = vld [vmem:[%s1 + $0x1c] sm:$0xf]
        %v286 = vld [vmem:[%s1 + $0x20] sm:$0xf]
        %v287 = vld [vmem:[%s1 + $0x24] sm:$0xf]
        %v288 = vld [vmem:[%s1 + $0x28] sm:$0xf]
        %v289 = vld [vmem:[%s1 + $0x2c] sm:$0xf]
        %v290 = vld [vmem:[%s1 + $0x30] sm:$0xf]
        %v291 = vld [vmem:[%s1 + $0x34] sm:$0xf]
        %v292 = vld [vmem:[%s1 + $0x38] sm:$0xf]
        %v293 = vld [vmem:[%s1 + $0x3c] sm:$0xf]
        %v296 = vunpack.c.l.b16 %v276
        %v297 = vunpack.c.l.b16 %v277
        %v298 = vpack.c.b16 %v297, %v296
        %v316 = vunpack.c.l.b16 %v278
        %v317 = vunpack.c.l.b16 %v279
        %v318 = vunpack.c.l.b16 %v280
        %v319 = vunpack.c.l.b16 %v281
        %v320 = vunpack.c.l.b16 %v282
        %v321 = vunpack.c.l.b16 %v283
        %v322 = vunpack.c.l.b16 %v284
        %v323 = vunpack.c.l.b16 %v285
        %v324 = vunpack.c.l.b16 %v286
        %v325 = vunpack.c.l.b16 %v287
        %v326 = vunpack.c.l.b16 %v288
        %v327 = vunpack.c.l.b16 %v289
        %v328 = vunpack.c.l.b16 %v290
        %v329 = vunpack.c.l.b16 %v291
        %v330 = vunpack.c.l.b16 %v292
        %v331 = vunpack.c.l.b16 %v293
        %v332 = vpack.c.b16 %v317, %v316
        %v333 = vpack.c.b16 %v319, %v318
        %v334 = vpack.c.b16 %v321, %v320
        %v335 = vpack.c.b16 %v323, %v322
        %v336 = vpack.c.b16 %v325, %v324
        %v337 = vpack.c.b16 %v327, %v326
        %v338 = vpack.c.b16 %v329, %v328
        %v339 = vpack.c.b16 %v331, %v330
        %348 = vmatpush.bf16.msra.mxu0 %v339
        %349 = vmatpush.bf16.msra.mxu0 %v338
        %350 = vmatpush.bf16.msra.mxu0 %v337
        %351 = vmatpush.bf16.msra.mxu0 %v336
        %352 = vmatpush.bf16.msra.mxu0 %v335
        %353 = vmatpush.bf16.msra.mxu0 %v334
        %354 = vmatpush.bf16.msra.mxu0 %v333
        %355 = vmatpush.bf16.msra.mxu0 %v332
        %356 = vmatmul.bf16.gmra.mxu0 %v298
        %v357 = vpop.f32.mrf.mxu0
        %v358 = vadd.f32 0.0, %v357
        %v359 = vpop.f32.mrf.mxu0
        %v360 = vadd.f32 0.0, %v359
        %361 = vdwg.mxu0
        %v362 = vadd.f32 %v274, %v358
        %v363 = vadd.f32 %v275, %v360
        %364 = vst [vmem:[#allocation2] sm:$0xff] %v362
        %365 = vst [vmem:[#allocation2 + $0x8] sm:$0xff] %v363
        // Predicated region
        $region49: #{cl_encoder_mlp.1} parent=39 // pred_check
          %p366 = pneg %p268
        $region50: #{cl_encoder_mlp.1} parent=39 // pred_check_branch
          %368 = sbr.rel (%p366) target = $region52
        $region51: #{cl_encoder_mlp.1} parent=39 // pred_region
          %v369 = vld [vmem:[#allocation2] sm:$0xff]
          %v370 = vld [vmem:[#allocation2 + $0x8] sm:$0xff]
          %v371 = vld [vmem:[%s2] sm:$0x1]
          %v373 = vperm.slane %v371, 0
          %v375 = vadd.f32 %v369, %v373
          %v376 = vadd.f32 %v370, %v373
          %v377 = vmax.f32 %v375, 0.0
          %v378 = vmax.f32 %v376, 0.0
          %v379 = vpack.c.bf16 %v378, %v377
          %v380 = vld [vmem:[#allocation3] sm:$0xf]
          %v381 = vld [vmem:[#allocation3 + $0x4] sm:$0xf]
          %v382 = vld [vmem:[#allocation3 + $0x8] sm:$0xf]
          %v383 = vld [vmem:[#allocation3 + $0xc] sm:$0xf]
          %v384 = vld [vmem:[#allocation3 + $0x10] sm:$0xf]
          %v385 = vld [vmem:[#allocation3 + $0x14] sm:$0xf]
          %v386 = vld [vmem:[#allocation3 + $0x18] sm:$0xf]
          %v387 = vld [vmem:[#allocation3 + $0x1c] sm:$0xf]
          %v388 = vld [vmem:[#allocation3 + $0x20] sm:$0xf]
          %v389 = vld [vmem:[#allocation3 + $0x24] sm:$0xf]
          %v390 = vld [vmem:[#allocation3 + $0x28] sm:$0xf]
          %v391 = vld [vmem:[#allocation3 + $0x2c] sm:$0xf]
          %v392 = vld [vmem:[#allocation3 + $0x30] sm:$0xf]
          %v393 = vld [vmem:[#allocation3 + $0x34] sm:$0xf]
          %v394 = vld [vmem:[#allocation3 + $0x38] sm:$0xf]
          %v395 = vld [vmem:[#allocation3 + $0x3c] sm:$0xf]
          %v396 = vld [vmem:[%s4] sm:$0x1]
          %v398 = vperm.slane %v396, 0
          %v416 = vunpack.c.l.b16 %v380
          %v417 = vunpack.c.l.b16 %v381
          %v418 = vunpack.c.l.b16 %v382
          %v419 = vunpack.c.l.b16 %v383
          %v420 = vunpack.c.l.b16 %v384
          %v421 = vunpack.c.l.b16 %v385
          %v422 = vunpack.c.l.b16 %v386
          %v423 = vunpack.c.l.b16 %v387
          %v424 = vunpack.c.l.b16 %v388
          %v425 = vunpack.c.l.b16 %v389
          %v426 = vunpack.c.l.b16 %v390
          %v427 = vunpack.c.l.b16 %v391
          %v428 = vunpack.c.l.b16 %v392
          %v429 = vunpack.c.l.b16 %v393
          %v430 = vunpack.c.l.b16 %v394
          %v431 = vunpack.c.l.b16 %v395
          %v432 = vpack.c.b16 %v417, %v416
          %v433 = vpack.c.b16 %v419, %v418
          %v434 = vpack.c.b16 %v421, %v420
          %v435 = vpack.c.b16 %v423, %v422
          %v436 = vpack.c.b16 %v425, %v424
          %v437 = vpack.c.b16 %v427, %v426
          %v438 = vpack.c.b16 %v429, %v428
          %v439 = vpack.c.b16 %v431, %v430
          %448 = vmatpush.bf16.msra.mxu0 %v439
          %449 = vmatpush.bf16.msra.mxu0 %v438
          %450 = vmatpush.bf16.msra.mxu0 %v437
          %451 = vmatpush.bf16.msra.mxu0 %v436
          %452 = vmatpush.bf16.msra.mxu0 %v435
          %453 = vmatpush.bf16.msra.mxu0 %v434
          %454 = vmatpush.bf16.msra.mxu0 %v433
          %455 = vmatpush.bf16.msra.mxu0 %v432
          %456 = vmatmul.bf16.gmra.mxu0 %v379
          %v457 = vpop.f32.mrf.mxu0
          %v458 = vadd.f32 %v398, %v457
          %v459 = vpop.f32.mrf.mxu0
          %v460 = vadd.f32 %v398, %v459
          %461 = vdwg.mxu0
          %v462 = vpack.c.bf16 %v458, %v458
          %v463 = vpack.c.bf16 %v460, %v460
          %464 = vst [vmem:[%s266] sm:$0xf] %v462
          %465 = vst [vmem:[%s266 + $0x4] sm:$0xf] %v463
        $region52: #{cl_encoder_mlp.1} parent=39 // pred_fallthru
          _
        %s466 = smul.u32 2, %s21
        %p467 = scmp.lt.s32.totalorder %s466, 3
        %s468 = scalar_select %p467, %s466, 3
        %s469 = smul.addr %s468, 4
        %s470 = scalar_lea.vmem %s5, %s469
        // Predicated region
        $region53: #{cl_encoder_mlp.1} parent=39 // pred_check
          %p471 = pneg %p159
        $region54: #{cl_encoder_mlp.1} parent=39 // pred_check_branch
          %473 = sbr.rel (%p471) target = $region56
        $region55: #{cl_encoder_mlp.1} parent=39 // pred_region
          %s474 = smul.u32 2, %s21
        $region56: #{cl_encoder_mlp.1} parent=39 // pred_fallthru
          _
      $region40: #{cl_encoder_mlp.1} parent=5 // pred_fallthru
        _
      %p475 = scmp.le.s32.totalorder 2, %s12
      // Predicated region
      $region57: #{cl_encoder_mlp.1} parent=5 // pred_check
        %p476 = pneg %p475
      $region58: #{cl_encoder_mlp.1} parent=5 // pred_check_branch
        %478 = sbr.rel (%p476) target = $region60
      $region59: #{cl_encoder_mlp.1} parent=5 // pred_region
        %s479 = ssub.s32 %s12, 2
        // Predicated region
        $region61: #{cl_encoder_mlp.1} parent=59 // pred_check
          %p480 = pneg %p165
        $region62: #{cl_encoder_mlp.1} parent=59 // pred_check_branch
          %482 = sbr.rel (%p480) target = $region64
        $region63: #{cl_encoder_mlp.1} parent=59 // pred_region
          %s483 = smul.u32 2, %s23
          %p484 = scmp.lt.s32.totalorder %s483, 3
          %s485 = scalar_select %p484, %s483, 3
          %s486 = smul.addr %s485, 4
          %s487 = scalar_lea.vmem %s5, %s486
        $region64: #{cl_encoder_mlp.1} parent=59 // pred_fallthru
          _
      $region60: #{cl_encoder_mlp.1} parent=5 // pred_fallthru
        _
    $region6: #{cl_encoder_mlp.1} parent=1 // loop_footer
      %s16 = sadd.s32 1, %s12
    $region7: #{cl_encoder_mlp.1} parent=1 // loop_footer_branch
      %11 = sbr.rel target = $region3
    $region8: #{cl_encoder_mlp.1} parent=1 // loop_exit
      _
    %488 = vsyncpa [#allocation4], 1
    %s489 = scalar_lea.sflag [#allocation4], 1
    %490 = vsyncpa %s489, 1

</llo_original>
